<compile_context>
chip_gen: v6e
topology: v6e:2x2x1
jax: 0.10.0
libtpu: 0.0.40
codegen_flags: <defaults>
</compile_context>

<pallas_src>
import math

import jax
import jax.numpy as jnp
from jax.experimental import pallas as pl
from jax.experimental.pallas import tpu as pltpu

_PI = 3.14159  # matches the torch.jit.script gaussian()
_A = math.sqrt(2.0 * _PI)
_SQRT_HALF = math.sqrt(0.5)


def _gaussian_kernel(t_ref, const_ref, o_ref):
    """One grid step: produce a (tm, K) lane-dense output slab.

    t_ref:     (128, S) f32, lane-dense.  t_ref[c, s] is the scalar for output
               row s*128 + c of this block.
    const_ref: (8, K) f32.  row0 = mean, row1 = sqrt(0.5)/std, row2 = 1/(A*std).
    o_ref:     (tm, K) = (S*128, K) in the output dtype.
    """
    S = t_ref.shape[1]
    mean = const_ref[0:1, :]          # (1, K)
    sinv = const_ref[1:2, :]          # (1, K)  sqrt(0.5)/std
    coef = const_ref[2:3, :]          # (1, K)  1/(sqrt(2*pi)*std)

    out_is_bf16 = o_ref.dtype == jnp.bfloat16
    coef_lp = coef.astype(jnp.bfloat16) if out_is_bf16 else None

    t_all = t_ref[...]                # (128, S), a handful of vregs

    # exp(-0.5*((t-mean)/std)^2) / (A*std) == exp(-((t-mean)*sinv)^2) * coef
    for s in range(S):                # static unroll; S <= 128
        t_col = t_all[:, s:s + 1]                      # (128, 1) lane column
        d = (t_col - mean) * sinv                      # broadcast -> (128, K)
        q = -(d * d)
        if out_is_bf16:
            # bf16 exp doubles EUP throughput on v6e/v7x; only when output is bf16.
            g = jnp.exp(q.astype(jnp.bfloat16)) * coef_lp
        else:
            g = jnp.exp(q) * coef
        o_ref[s * 128:(s + 1) * 128, :] = g.astype(o_ref.dtype)


def _choose_tm(M, out_itemsize):
    """Largest row tile (multiple of 128) with >=4 grid steps (>=2 per TC)."""
    if out_itemsize <= 2:
        candidates = (16384, 8192, 4096, 2048, 1024, 512, 256, 128)
    else:
        candidates = (8192, 4096, 2048, 1024, 512, 256, 128)
    for c in candidates:                      # exact division, >= 4 steps
        if M % c == 0 and M // c >= 4:
            return c
    for c in candidates:                      # >= 4 steps, partial last block OK
        if pl.cdiv(M, c) >= 4:
            return c
    for c in candidates:                      # small M: exact division if possible
        if M % c == 0:
            return c
    return 128


@jax.jit
def gaussian_layer(x, edge_types, means_w, stds_w, mul_w, bias_w):
    """Pallas implementation of GaussianLayer.forward.

    x:          (B, N, N) float distances
    edge_types: (B, N, N) int32 indices into mul/bias embeddings
    means_w:    (1, K), stds_w: (1, K), mul_w: (E, 1), bias_w: (E, 1)
    returns:    (B, N, N, K) with dtype of means_w  (.type_as(self.means.weight))
    """
    B, N, _ = x.shape
    K = means_w.shape[-1]
    M = B * N * N
    out_dtype = means_w.dtype

    # --- glue (XLA): embedding gathers + fused mul*x + bias -> one f32 scalar/row
    mul = jnp.take(mul_w, edge_types, axis=0)            # (B, N, N, 1)
    bias = jnp.take(bias_w, edge_types, axis=0)          # (B, N, N, 1)
    t = (mul.astype(jnp.float32) * x[..., None].astype(jnp.float32)
         + bias.astype(jnp.float32)).reshape(M)          # (M,)

    # --- per-basis constants with the divides folded away, packed into (8, K)
    mean = means_w.reshape(K).astype(jnp.float32)
    std = jnp.abs(stds_w.reshape(K)).astype(jnp.float32) + 1e-5
    consts = jnp.zeros((8, K), jnp.float32)
    consts = consts.at[0].set(mean)
    consts = consts.at[1].set(_SQRT_HALF / std)
    consts = consts.at[2].set(1.0 / (_A * std))

    # --- tiling
    tm = _choose_tm(M, out_dtype.itemsize)
    S = tm // 128
    G = pl.cdiv(M, tm)
    Mp = G * tm

    # Lane-dense, per-block-transposed layout for t: block i is a (128, S)
    # tile with tile[c, s] = t[i*tm + s*128 + c].  t is tiny (M*4 bytes), and
    # XLA fuses this relayout into the mul*x+bias pass.
    if Mp != M:
        t = jnp.pad(t, (0, Mp - M))
    t_tiles = t.reshape(G, S, 128).transpose(0, 2, 1).reshape(G * 128, S)

    # --- right-sized VMEM budget: double-buffered output + input + slack
    vmem_bytes = (2 * tm * K * out_dtype.itemsize              # output dbl buffer
                  + 2 * 128 * (pl.cdiv(S, 128) * 128) * 4      # t dbl buffer (lane-padded)
                  + 8 * K * 4                                  # packed constants
                  + 12 * 1024 * 1024)                          # compiler slack
    vmem_bytes = int(max(16 * 1024 * 1024, min(vmem_bytes, 48 * 1024 * 1024)))

    out = pl.pallas_call(
        _gaussian_kernel,
        out_shape=jax.ShapeDtypeStruct((M, K), out_dtype),
        grid_spec=pltpu.PrefetchScalarGridSpec(
            num_scalar_prefetch=0,
            grid=(G,),
            in_specs=[
                pl.BlockSpec((128, S), lambda i: (i, 0)),   # lane-dense t tile
                pl.BlockSpec((8, K), lambda i: (0, 0)),     # packed constants
            ],
            out_specs=pl.BlockSpec((tm, K), lambda i: (i, 0)),
        ),
        compiler_params=pltpu.CompilerParams(
            dimension_semantics=("parallel",),
            vmem_limit_bytes=vmem_bytes,
        ),
    )(t_tiles, consts)

    return out.reshape(B, N, N, K)


def _reference(x, edge_types, means_w, stds_w, mul_w, bias_w):
    K = means_w.shape[-1]
    mul = jnp.take(mul_w, edge_types, axis=0)
    bias = jnp.take(bias_w, edge_types, axis=0)
    t = (mul * x[..., None] + bias).astype(jnp.float32)
    t = jnp.broadcast_to(t, t.shape[:-1] + (K,))
    mean = means_w.reshape(-1).astype(jnp.float32)
    std = jnp.abs(stds_w.reshape(-1)).astype(jnp.float32) + 1e-5
    g = jnp.exp(-0.5 * ((t - mean) / std) ** 2) / (_A * std)
    return g.astype(means_w.dtype)


if __name__ == "__main__":
    # Module config: K=128 gaussian basis functions, 1024 edge types.
    K = 128
    EDGE_TYPES = 1024
    B, N = 2, 8   # small (B, N, N) pairwise-distance input

    key = jax.random.PRNGKey(0)
    k_means, k_stds, k_x, k_et = jax.random.split(key, 4)

    # Deterministic parameter init, matching nn.init in __init__:
    means_w = jax.random.uniform(k_means, (1, K), jnp.float32, 0.0, 3.0)
    stds_w = jax.random.uniform(k_stds, (1, K), jnp.float32, 0.0, 3.0)
    mul_w = jnp.ones((EDGE_TYPES, 1), jnp.float32)      # constant 1
    bias_w = jnp.zeros((EDGE_TYPES, 1), jnp.float32)    # constant 0

    x = jax.random.uniform(k_x, (B, N, N), jnp.float32, 0.0, 5.0)
    edge_types = jax.random.randint(k_et, (B, N, N), 0, EDGE_TYPES, jnp.int32)

    out = gaussian_layer(x, edge_types, means_w, stds_w, mul_w, bias_w)
    out = jax.block_until_ready(out)

    ref = _reference(x, edge_types, means_w, stds_w, mul_w, bias_w)
    assert out.shape == (B, N, N, K)
    assert out.dtype == means_w.dtype
    assert jnp.allclose(out, ref, atol=1e-5, rtol=1e-4)

    print("KERNEL_OK")
</pallas_src>

<mosaic_0001>
module attributes {stable_mosaic.version = 11 : i64} {
  func.func @_gaussian_kernel(%arg0: i32, %arg1: memref<128x1xf32, #tpu.memory_space<vmem>>, %arg2: memref<8x128xf32, #tpu.memory_space<vmem>>, %arg3: memref<128x128xf32, #tpu.memory_space<vmem>>) attributes {dimension_semantics = [#tpu.dimension_semantics<parallel>], iteration_bounds = array<i64: 1>, scalar_prefetch = 0 : i64, scratch_operands = 0 : i64, tpu.core_type = #tpu.core_type<tc>, window_params = [{transform_indices = @transform_0, window_bounds = array<i64: 128, 1>}, {pipeline_mode = #tpu.pipeline_mode<synchronous>, transform_indices = @transform_1, window_bounds = array<i64: 8, 128>}, {transform_indices = @transform_2, window_bounds = array<i64: 128, 128>}]} {
    %c0 = arith.constant 0 : index
    %c0_0 = arith.constant 0 : index
    %0 = vector.load %arg2[%c0, %c0_0] : memref<8x128xf32, #tpu.memory_space<vmem>>, vector<1x128xf32>
    %c1 = arith.constant 1 : index
    %c0_1 = arith.constant 0 : index
    %1 = vector.load %arg2[%c1, %c0_1] : memref<8x128xf32, #tpu.memory_space<vmem>>, vector<1x128xf32>
    %c2 = arith.constant 2 : index
    %c0_2 = arith.constant 0 : index
    %2 = vector.load %arg2[%c2, %c0_2] : memref<8x128xf32, #tpu.memory_space<vmem>>, vector<1x128xf32>
    %c0_3 = arith.constant 0 : index
    %c0_4 = arith.constant 0 : index
    %3 = vector.load %arg1[%c0_3, %c0_4] : memref<128x1xf32, #tpu.memory_space<vmem>>, vector<128x1xf32>
    %4 = vector.broadcast %3 : vector<128x1xf32> to vector<128x128xf32>
    %5 = vector.broadcast %0 : vector<1x128xf32> to vector<128x128xf32>
    %6 = arith.subf %4, %5 : vector<128x128xf32>
    %7 = vector.broadcast %1 : vector<1x128xf32> to vector<128x128xf32>
    %8 = arith.mulf %6, %7 : vector<128x128xf32>
    %9 = arith.mulf %8, %8 : vector<128x128xf32>
    %cst = arith.constant 0.000000e+00 : f32
    %10 = vector.broadcast %cst : f32 to vector<128x128xf32>
    %11 = arith.subf %10, %9 : vector<128x128xf32>
    %12 = math.exp %11 : vector<128x128xf32>
    %13 = vector.broadcast %2 : vector<1x128xf32> to vector<128x128xf32>
    %14 = arith.mulf %12, %13 : vector<128x128xf32>
    %c0_5 = arith.constant 0 : index
    %c0_6 = arith.constant 0 : index
    %15 = vector.load %arg3[%c0_5, %c0_6] : memref<128x128xf32, #tpu.memory_space<vmem>>, vector<128x128xf32>
    tpu.vector_store %arg3[%c0_5, %c0_6], %14 {strides = array<i32>} : memref<128x128xf32, #tpu.memory_space<vmem>>, vector<128x128xf32>,
    return
  }
  func.func @transform_0(%arg0: i32) -> (i32, i32) {
    %c0_i32 = arith.constant 0 : i32
    %c0_i32_0 = arith.constant 0 : i32
    return %arg0, %c0_i32 : i32, i32
  }
  func.func @transform_1(%arg0: i32) -> (i32, i32) {
    %c0_i32 = arith.constant 0 : i32
    %c0_i32_0 = arith.constant 0 : i32
    %c0_i32_1 = arith.constant 0 : i32
    return %c0_i32, %c0_i32_0 : i32, i32
  }
  func.func @transform_2(%arg0: i32) -> (i32, i32) {
    %c0_i32 = arith.constant 0 : i32
    %c0_i32_0 = arith.constant 0 : i32
    return %arg0, %c0_i32 : i32, i32
  }
}

</mosaic_0001>

<llo_original>
// kernel: gaussian_layer.1
$region0: #{gaussian_layer.1}
  #allocation0 [shape = 'u32[]', space=smem, size = 0x4, offset = 0x4, fixed_abs, tag = 'smem constant byte address 0x4 - core index']
  #allocation1 [shape = 'u32[144,128]{1,0:T(1,128)}', space=vmem, size = 0x12000, scoped, tag = 'internal scratch']
  %s0 = inlined_call_operand.vmem [shape: f32[128,1], index: 0, kind: input, shape index: {}]
  %s1 = inlined_call_operand.vmem [shape: f32[8,128], index: 1, kind: input, shape index: {}]
  %s2 = inlined_call_operand.hbm [shape: f32[128,128], index: 2, kind: output, shape index: {}]
  %s3 = sld [smem:[#allocation0]]
  $region18: #{gaussian_layer.1} parent=0
    _
  %s5 = ssub.s32 1, %s3
  %s6 = scalar_select 0, %s5, %s3
  $region1: #{gaussian_layer.1} parent=0
    #allocation2 [shape = 'u8[65536]{0}', space=vmem, size = 0x10000, scoped, tag = 'output window, operand 0, single buffered']
    #allocation3 [shape = 's32[1]{0}', space=sflag, size = 0x4, scoped, tag = 'scoped memory for gaussian_layer.1']
    %7 = vsyncpa [#allocation3], 0
    // Predicated region
    $region2: #{gaussian_layer.1} parent=1 // pred_check
      _
    $region3: #{gaussian_layer.1} parent=1 // pred_check_branch
      %9 = sbr.rel (0) target = $region5
    $region4: #{gaussian_layer.1} parent=1 // pred_region
      _
    $region5: #{gaussian_layer.1} parent=1 // pred_fallthru
      _
    // Predicated region
    $region6: #{gaussian_layer.1} parent=1 // pred_check
      _
    $region7: #{gaussian_layer.1} parent=1 // pred_check_branch
      %11 = sbr.rel (0) target = $region9
    $region8: #{gaussian_layer.1} parent=1 // pred_region
      _
    $region9: #{gaussian_layer.1} parent=1 // pred_fallthru
      _
    %v12 = vld [vmem:[%s1] sm:$0x1]
    %v13 = vld [vmem:[%s1 + $0x1] sm:$0x1]
    %v14 = vld [vmem:[%s1 + $0x2] sm:$0x1]
    %v15 = vld [vmem:[%s0] sm:$0xff]
    %v16 = vld [vmem:[%s0 + $0x8] sm:$0xff]
    %v17 = vld [vmem:[%s0 + $0x10] sm:$0xff]
    %v18 = vld [vmem:[%s0 + $0x18] sm:$0xff]
    %v19 = vld [vmem:[%s0 + $0x20] sm:$0xff]
    %v20 = vld [vmem:[%s0 + $0x28] sm:$0xff]
    %v21 = vld [vmem:[%s0 + $0x30] sm:$0xff]
    %v22 = vld [vmem:[%s0 + $0x38] sm:$0xff]
    %v23 = vld [vmem:[%s0 + $0x40] sm:$0xff]
    %v24 = vld [vmem:[%s0 + $0x48] sm:$0xff]
    %v25 = vld [vmem:[%s0 + $0x50] sm:$0xff]
    %v26 = vld [vmem:[%s0 + $0x58] sm:$0xff]
    %v27 = vld [vmem:[%s0 + $0x60] sm:$0xff]
    %v28 = vld [vmem:[%s0 + $0x68] sm:$0xff]
    %v29 = vld [vmem:[%s0 + $0x70] sm:$0xff]
    %v30 = vld [vmem:[%s0 + $0x78] sm:$0xff]
    %32 = vset.pattern.permute.xlu0 0
    %33 = vperm.xlu0 %32, %v15
    %v34 = vpop.permute.xlu0 %33
    %37 = vset.pattern.permute.xlu0 0
    %38 = vperm.xlu0 %37, %v16
    %v39 = vpop.permute.xlu0 %38
    %42 = vset.pattern.permute.xlu0 0
    %43 = vperm.xlu0 %42, %v17
    %v44 = vpop.permute.xlu0 %43
    %47 = vset.pattern.permute.xlu0 0
    %48 = vperm.xlu0 %47, %v18
    %v49 = vpop.permute.xlu0 %48
    %52 = vset.pattern.permute.xlu0 0
    %53 = vperm.xlu0 %52, %v19
    %v54 = vpop.permute.xlu0 %53
    %57 = vset.pattern.permute.xlu0 0
    %58 = vperm.xlu0 %57, %v20
    %v59 = vpop.permute.xlu0 %58
    %62 = vset.pattern.permute.xlu0 0
    %63 = vperm.xlu0 %62, %v21
    %v64 = vpop.permute.xlu0 %63
    %67 = vset.pattern.permute.xlu0 0
    %68 = vperm.xlu0 %67, %v22
    %v69 = vpop.permute.xlu0 %68
    %72 = vset.pattern.permute.xlu0 0
    %73 = vperm.xlu0 %72, %v23
    %v74 = vpop.permute.xlu0 %73
    %77 = vset.pattern.permute.xlu0 0
    %78 = vperm.xlu0 %77, %v24
    %v79 = vpop.permute.xlu0 %78
    %82 = vset.pattern.permute.xlu0 0
    %83 = vperm.xlu0 %82, %v25
    %v84 = vpop.permute.xlu0 %83
    %87 = vset.pattern.permute.xlu0 0
    %88 = vperm.xlu0 %87, %v26
    %v89 = vpop.permute.xlu0 %88
    %92 = vset.pattern.permute.xlu0 0
    %93 = vperm.xlu0 %92, %v27
    %v94 = vpop.permute.xlu0 %93
    %97 = vset.pattern.permute.xlu0 0
    %98 = vperm.xlu0 %97, %v28
    %v99 = vpop.permute.xlu0 %98
    %102 = vset.pattern.permute.xlu0 0
    %103 = vperm.xlu0 %102, %v29
    %v104 = vpop.permute.xlu0 %103
    %107 = vset.pattern.permute.xlu0 0
    %108 = vperm.xlu0 %107, %v30
    %v109 = vpop.permute.xlu0 %108
    %v111 = vlaneseq
    %v112 = vshrl.u32 %v111, 7
    %v113 = vsub.s32 0, %v112
    %v114 = vrot.slane %v12, %v113
    %v115 = vsub.f32 %v34, %v114
    %v116 = vsub.f32 %v39, %v114
    %v117 = vsub.f32 %v44, %v114
    %v118 = vsub.f32 %v49, %v114
    %v119 = vsub.f32 %v54, %v114
    %v120 = vsub.f32 %v59, %v114
    %v121 = vsub.f32 %v64, %v114
    %v122 = vsub.f32 %v69, %v114
    %v123 = vsub.f32 %v74, %v114
    %v124 = vsub.f32 %v79, %v114
    %v125 = vsub.f32 %v84, %v114
    %v126 = vsub.f32 %v89, %v114
    %v127 = vsub.f32 %v94, %v114
    %v128 = vsub.f32 %v99, %v114
    %v129 = vsub.f32 %v104, %v114
    %v130 = vsub.f32 %v109, %v114
    %v131 = vlaneseq
    %v132 = vshrl.u32 %v131, 7
    %v133 = vsub.s32 0, %v132
    %v134 = vrot.slane %v13, %v133
    %v135 = vmul.f32 %v115, %v134
    %v136 = vmul.f32 %v116, %v134
    %v137 = vmul.f32 %v117, %v134
    %v138 = vmul.f32 %v118, %v134
    %v139 = vmul.f32 %v119, %v134
    %v140 = vmul.f32 %v120, %v134
    %v141 = vmul.f32 %v121, %v134
    %v142 = vmul.f32 %v122, %v134
    %v143 = vmul.f32 %v123, %v134
    %v144 = vmul.f32 %v124, %v134
    %v145 = vmul.f32 %v125, %v134
    %v146 = vmul.f32 %v126, %v134
    %v147 = vmul.f32 %v127, %v134
    %v148 = vmul.f32 %v128, %v134
    %v149 = vmul.f32 %v129, %v134
    %v150 = vmul.f32 %v130, %v134
    %v151 = vmul.f32 %v135, %v135
    %v152 = vmul.f32 %v136, %v136
    %v153 = vmul.f32 %v137, %v137
    %v154 = vmul.f32 %v138, %v138
    %v155 = vmul.f32 %v139, %v139
    %v156 = vmul.f32 %v140, %v140
    %v157 = vmul.f32 %v141, %v141
    %v158 = vmul.f32 %v142, %v142
    %v159 = vmul.f32 %v143, %v143
    %v160 = vmul.f32 %v144, %v144
    %v161 = vmul.f32 %v145, %v145
    %v162 = vmul.f32 %v146, %v146
    %v163 = vmul.f32 %v147, %v147
    %v164 = vmul.f32 %v148, %v148
    %v165 = vmul.f32 %v149, %v149
    %v166 = vmul.f32 %v150, %v150
    %v167 = vsub.f32 0.0, %v151
    %v168 = vsub.f32 0.0, %v152
    %v169 = vsub.f32 0.0, %v153
    %v170 = vsub.f32 0.0, %v154
    %v171 = vsub.f32 0.0, %v155
    %v172 = vsub.f32 0.0, %v156
    %v173 = vsub.f32 0.0, %v157
    %v174 = vsub.f32 0.0, %v158
    %v175 = vsub.f32 0.0, %v159
    %v176 = vsub.f32 0.0, %v160
    %v177 = vsub.f32 0.0, %v161
    %v178 = vsub.f32 0.0, %v162
    %v179 = vsub.f32 0.0, %v163
    %v180 = vsub.f32 0.0, %v164
    %v181 = vsub.f32 0.0, %v165
    %v182 = vsub.f32 0.0, %v166
    %v183 = vmul.f32 %v167, 1.442695
    %v184 = vpow.pop %v183
    %v185 = vmul.f32 %v168, 1.442695
    %v186 = vpow.pop %v185
    %v187 = vmul.f32 %v169, 1.442695
    %v188 = vpow.pop %v187
    %v189 = vmul.f32 %v170, 1.442695
    %v190 = vpow.pop %v189
    %v191 = vmul.f32 %v171, 1.442695
    %v192 = vpow.pop %v191
    %v193 = vmul.f32 %v172, 1.442695
    %v194 = vpow.pop %v193
    %v195 = vmul.f32 %v173, 1.442695
    %v196 = vpow.pop %v195
    %v197 = vmul.f32 %v174, 1.442695
    %v198 = vpow.pop %v197
    %v199 = vmul.f32 %v175, 1.442695
    %v200 = vpow.pop %v199
    %v201 = vmul.f32 %v176, 1.442695
    %v202 = vpow.pop %v201
    %v203 = vmul.f32 %v177, 1.442695
    %v204 = vpow.pop %v203
    %v205 = vmul.f32 %v178, 1.442695
    %v206 = vpow.pop %v205
    %v207 = vmul.f32 %v179, 1.442695
    %v208 = vpow.pop %v207
    %v209 = vmul.f32 %v180, 1.442695
    %v210 = vpow.pop %v209
    %v211 = vmul.f32 %v181, 1.442695
    %v212 = vpow.pop %v211
    %v213 = vmul.f32 %v182, 1.442695
    %v214 = vpow.pop %v213
    %v215 = vlaneseq
    %v216 = vshrl.u32 %v215, 7
    %v217 = vsub.s32 0, %v216
    %v218 = vrot.slane %v14, %v217
    %v219 = vmul.f32 %v184, %v218
    %v220 = vmul.f32 %v186, %v218
    %v221 = vmul.f32 %v188, %v218
    %v222 = vmul.f32 %v190, %v218
    %v223 = vmul.f32 %v192, %v218
    %v224 = vmul.f32 %v194, %v218
    %v225 = vmul.f32 %v196, %v218
    %v226 = vmul.f32 %v198, %v218
    %v227 = vmul.f32 %v200, %v218
    %v228 = vmul.f32 %v202, %v218
    %v229 = vmul.f32 %v204, %v218
    %v230 = vmul.f32 %v206, %v218
    %v231 = vmul.f32 %v208, %v218
    %v232 = vmul.f32 %v210, %v218
    %v233 = vmul.f32 %v212, %v218
    %v234 = vmul.f32 %v214, %v218
    %235 = vst [vmem:[#allocation2] sm:$0xff] %v219
    %236 = vst [vmem:[#allocation2 + $0x8] sm:$0xff] %v220
    %237 = vst [vmem:[#allocation2 + $0x10] sm:$0xff] %v221
    %238 = vst [vmem:[#allocation2 + $0x18] sm:$0xff] %v222
    %239 = vst [vmem:[#allocation2 + $0x20] sm:$0xff] %v223
    %240 = vst [vmem:[#allocation2 + $0x28] sm:$0xff] %v224
    %241 = vst [vmem:[#allocation2 + $0x30] sm:$0xff] %v225
    %242 = vst [vmem:[#allocation2 + $0x38] sm:$0xff] %v226
    %243 = vst [vmem:[#allocation2 + $0x40] sm:$0xff] %v227
    %244 = vst [vmem:[#allocation2 + $0x48] sm:$0xff] %v228
    %245 = vst [vmem:[#allocation2 + $0x50] sm:$0xff] %v229
    %246 = vst [vmem:[#allocation2 + $0x58] sm:$0xff] %v230
    %247 = vst [vmem:[#allocation2 + $0x60] sm:$0xff] %v231
    %248 = vst [vmem:[#allocation2 + $0x68] sm:$0xff] %v232
    %249 = vst [vmem:[#allocation2 + $0x70] sm:$0xff] %v233
    %250 = vst [vmem:[#allocation2 + $0x78] sm:$0xff] %v234
    // Predicated region
    $region10: #{gaussian_layer.1} parent=1 // pred_check
      _
    $region11: #{gaussian_layer.1} parent=1 // pred_check_branch
      %252 = sbr.rel (0) target = $region13
    $region12: #{gaussian_layer.1} parent=1 // pred_region
      %s254 = ssub.s32 2048, 2048
      %255 = vsyncadd [#allocation3], %s254
      %s256 = sshll.u32 [#allocation2], 4
      %s257 = int_to_ptr.vmem [resolvable:$true] %s256
      %262 = dma.vmem_to_hbm [thread:$0]  %s257, 2048, %s2, [#allocation3], 128, 128, 8
    $region13: #{gaussian_layer.1} parent=1 // pred_fallthru
      _
    // Predicated region
    $region14: #{gaussian_layer.1} parent=1 // pred_check
      _
    $region15: #{gaussian_layer.1} parent=1 // pred_check_branch
      %264 = sbr.rel (0) target = $region17
    $region16: #{gaussian_layer.1} parent=1 // pred_region
      %265 = dma.done [#allocation3], 2048
    $region17: #{gaussian_layer.1} parent=1 // pred_fallthru
      _
    %266 = vsyncpa [#allocation3], 1

</llo_original>
